<compile_context>
chip_gen: v5e
topology: v5e:2x2
jax: 0.10.0
libtpu: 0.0.40
codegen_flags: <defaults>
</compile_context>

<pallas_src>
import math
import jax
import jax.numpy as jnp
from jax import lax
from jax.experimental import pallas as pl
from jax.experimental.pallas import tpu as pltpu


# ---------------------------------------------------------------------------
# Kernel 1: fused QKV projection
# ---------------------------------------------------------------------------
def _qkv_proj_kernel(x_ref, wqkv_ref, q_ref, k_ref, v_ref):
    # x_ref: (1, Tt, C); wqkv_ref: (C, 3C)  (1/sqrt(hs) already folded into Q)
    # q/k/v_ref: (1, H, Tt, hs)
    C = x_ref.shape[-1]
    H = q_ref.shape[1]
    hs = q_ref.shape[-1]

    qkv = jnp.dot(x_ref[0], wqkv_ref[...],
                  preferred_element_type=jnp.float32)          # (Tt, 3C) f32
    qkv = qkv.astype(q_ref.dtype)

    for h in range(H):  # static scatter into per-head slabs
        q_ref[0, h] = qkv[:, h * hs:(h + 1) * hs]
        k_ref[0, h] = qkv[:, C + h * hs:C + (h + 1) * hs]
        v_ref[0, h] = qkv[:, 2 * C + h * hs:2 * C + (h + 1) * hs]


# ---------------------------------------------------------------------------
# Kernel 2: causal flash attention + folded output projection
# ---------------------------------------------------------------------------
def _flash_mha_kernel(q_ref, k_ref, v_ref, wp_ref, bp_ref, o_ref,
                      m_sc, l_sc, acc_sc):
    # q_ref: (1, H, Tq, hs); k/v_ref: (1, H, Tk, hs)
    # wp_ref: (H, hs, C); bp_ref: (1, C) f32; o_ref: (1, Tq, C)
    # scratch: m/l (H, Tq, 1) f32, acc (H, Tq, hs) f32
    qi = pl.program_id(1)
    ki = pl.program_id(2)
    n_k = pl.num_programs(2)

    H, Tq, hs = acc_sc.shape
    Tk = k_ref.shape[2]
    C = o_ref.shape[-1]
    NEG = jnp.float32(-1e30)  # large finite negative (robust vs -inf)

    @pl.when(ki == 0)
    def _init():
        m_sc[...] = jnp.full_like(m_sc, NEG)
        l_sc[...] = jnp.zeros_like(l_sc)
        acc_sc[...] = jnp.zeros_like(acc_sc)

    # Causal tile skipping (requires Tq == Tk): kv tiles strictly above the
    # diagonal contribute nothing -> skip all compute (and all exp work).
    @pl.when(ki <= qi)
    def _compute():
        q = q_ref[0]                         # (H, Tq, hs)
        k = k_ref[0]                         # (H, Tk, hs)
        v = v_ref[0]                         # (H, Tk, hs)

        s = jnp.einsum('hqd,hkd->hqk', q, k,
                       preferred_element_type=jnp.float32)      # (H, Tq, Tk) f32

        # Mask only matters on the diagonal tile; off-diagonal (ki < qi) tiles
        # are fully visible so the select is a no-op there.
        row = lax.broadcasted_iota(jnp.int32, (Tq, Tk), 0)
        col = lax.broadcasted_iota(jnp.int32, (Tq, Tk), 1)
        keep = jnp.logical_or(ki < qi, row >= col)               # (Tq, Tk)
        s = jnp.where(keep[None, :, :], s, NEG)

        m_prev = m_sc[...]                                       # (H, Tq, 1)
        m_new = jnp.maximum(m_prev, jnp.max(s, axis=-1, keepdims=True))
        alpha = jnp.exp(m_prev - m_new)
        p = jnp.exp(s - m_new)                                   # (H, Tq, Tk) f32
        l_sc[...] = alpha * l_sc[...] + jnp.sum(p, axis=-1, keepdims=True)
        acc_sc[...] = alpha * acc_sc[...] + jnp.einsum(
            'hqk,hkd->hqd', p.astype(v.dtype), v,
            preferred_element_type=jnp.float32)
        m_sc[...] = m_new

    @pl.when(ki == n_k - 1)
    def _finalize():
        inv_l = pl.reciprocal(l_sc[...], approx=True)            # (H, Tq, 1)
        normed = (acc_sc[...] * inv_l).astype(wp_ref.dtype)      # (H, Tq, hs)
        # Fold the output projection per head: out = sum_h normed_h @ wp_h + b
        out = jnp.zeros((Tq, C), jnp.float32)
        for h in range(H):   # each matmul is lane-dense (N = C), no concat
            out = out + jnp.dot(normed[h], wp_ref[h],
                                preferred_element_type=jnp.float32)
        out = out + bp_ref[...]                                  # (1, C) broadcast
        o_ref[0] = out.astype(o_ref.dtype)


# ---------------------------------------------------------------------------
# Wrapper
# ---------------------------------------------------------------------------
def multi_head_attention(x, wq, wk, wv, wp, bp, *,
                         q_block=None, kv_block=None,
                         compute_dtype=jnp.bfloat16):
    """x: (B, T, C); wq/wk/wv: (H, C, hs); wp: (C, C); bp: (1, C) or (C,)."""
    B, T, C = x.shape
    H, Cw, hs = wq.shape
    assert Cw == C and H * hs == C, "num_heads * head_size must equal d_model"

    q_blk = q_block or min(T, 128)
    kv_blk = kv_block or q_blk
    assert q_blk == kv_blk, "causal tile skipping assumes square tiles"
    assert T % q_blk == 0, "sequence length must be divisible by the tile size"

    scale = 1.0 / math.sqrt(hs)

    # (H, C, hs) -> (C, H*hs) matching the torch.cat(head_outputs) column order.
    def fuse(w):
        return jnp.transpose(w, (1, 0, 2)).reshape(C, H * hs)

    # Fused QKV slab; 1/sqrt(hs) is baked into the Q columns (free at runtime).
    wqkv = jnp.concatenate([fuse(wq) * scale, fuse(wk), fuse(wv)], axis=-1)  # (C,3C)

    x_c = x.astype(compute_dtype)
    wqkv_c = wqkv.astype(compute_dtype)
    wp_h = wp.reshape(H, hs, C).astype(compute_dtype)   # per-head projection slabs
    bp_f = jnp.asarray(bp, jnp.float32).reshape(1, C)

    # ---- kernel 1: fused QKV projection --------------------------------------
    t_blk = min(T, 256)
    assert T % t_blk == 0
    q, k, v = pl.pallas_call(
        _qkv_proj_kernel,
        out_shape=(
            jax.ShapeDtypeStruct((B, H, T, hs), compute_dtype),
            jax.ShapeDtypeStruct((B, H, T, hs), compute_dtype),
            jax.ShapeDtypeStruct((B, H, T, hs), compute_dtype),
        ),
        grid_spec=pltpu.PrefetchScalarGridSpec(
            num_scalar_prefetch=0,
            grid=(B, T // t_blk),
            in_specs=[
                pl.BlockSpec((1, t_blk, C), lambda b, t: (b, t, 0)),
                pl.BlockSpec((C, 3 * C), lambda b, t: (0, 0)),
            ],
            out_specs=(
                pl.BlockSpec((1, H, t_blk, hs), lambda b, t: (b, 0, t, 0)),
                pl.BlockSpec((1, H, t_blk, hs), lambda b, t: (b, 0, t, 0)),
                pl.BlockSpec((1, H, t_blk, hs), lambda b, t: (b, 0, t, 0)),
            ),
        ),
        compiler_params=pltpu.CompilerParams(
            dimension_semantics=("parallel", "parallel"),
        ),
    )(x_c, wqkv_c)

    # ---- kernel 2: causal flash attention + output projection ---------------
    n_q = T // q_blk
    n_k = T // kv_blk
    cbytes = jnp.finfo(compute_dtype).bits // 8
    xbytes = jnp.finfo(x.dtype).bits // 8
    flops = int(B * (4 * H * T * T * hs + 2 * T * C * C))
    transcendentals = int(B * H * T * T)
    bytes_accessed = int(3 * B * H * T * hs * cbytes + H * hs * C * cbytes
                         + B * T * C * xbytes + 4 * C)

    out = pl.pallas_call(
        _flash_mha_kernel,
        out_shape=jax.ShapeDtypeStruct((B, T, C), x.dtype),
        grid_spec=pltpu.PrefetchScalarGridSpec(
            num_scalar_prefetch=0,
            grid=(B, n_q, n_k),
            in_specs=[
                pl.BlockSpec((1, H, q_blk, hs), lambda b, qi, ki: (b, 0, qi, 0)),
                pl.BlockSpec((1, H, kv_blk, hs), lambda b, qi, ki: (b, 0, ki, 0)),
                pl.BlockSpec((1, H, kv_blk, hs), lambda b, qi, ki: (b, 0, ki, 0)),
                pl.BlockSpec((H, hs, C), lambda b, qi, ki: (0, 0, 0)),
                pl.BlockSpec((1, C), lambda b, qi, ki: (0, 0)),
            ],
            out_specs=pl.BlockSpec((1, q_blk, C), lambda b, qi, ki: (b, qi, 0)),
            scratch_shapes=[
                pltpu.VMEM((H, q_blk, 1), jnp.float32),    # m (running max)
                pltpu.VMEM((H, q_blk, 1), jnp.float32),    # l (running sum)
                pltpu.VMEM((H, q_blk, hs), jnp.float32),   # acc
            ],
        ),
        compiler_params=pltpu.CompilerParams(
            dimension_semantics=("parallel", "parallel", "arbitrary"),
        ),
        cost_estimate=pl.CostEstimate(
            flops=flops,
            transcendentals=transcendentals,
            bytes_accessed=bytes_accessed,
        ),
    )(q, k, v, wp_h, bp_f)
    return out


# ---------------------------------------------------------------------------
# Pure-JAX reference (mirrors the PyTorch forward; dropout = identity)
# ---------------------------------------------------------------------------
def _reference(x, wq, wk, wv, wp, bp):
    B, T, C = x.shape
    H, _, hs = wq.shape
    scale = 1.0 / math.sqrt(hs)
    causal = jnp.tril(jnp.ones((T, T), dtype=bool))
    outs = []
    for h in range(H):
        q = x @ wq[h]
        k = x @ wk[h]
        v = x @ wv[h]
        s = (q @ jnp.swapaxes(k, -2, -1)) * scale
        s = jnp.where(causal, s, -jnp.inf)
        p = jax.nn.softmax(s, axis=-1)
        outs.append(p @ v)
    concat = jnp.concatenate(outs, axis=-1)
    return concat @ wp + bp


if __name__ == "__main__":
    # small deterministic config: d_model=32, num_heads=4, head_size=8,
    # context_length=8, batch=2
    B, T = 2, 8
    d_model, num_heads, head_size = 32, 4, 8

    key = jax.random.PRNGKey(0)
    kx, kq, kk, kv, kp, kb = jax.random.split(key, 6)

    x = jax.random.normal(kx, (B, T, d_model), dtype=jnp.float32)
    wq = jax.random.normal(kq, (num_heads, d_model, head_size), jnp.float32) * 0.1
    wk = jax.random.normal(kk, (num_heads, d_model, head_size), jnp.float32) * 0.1
    wv = jax.random.normal(kv, (num_heads, d_model, head_size), jnp.float32) * 0.1
    wp = jax.random.normal(kp, (d_model, d_model), jnp.float32) * 0.1
    bp = jax.random.normal(kb, (1, d_model), jnp.float32) * 0.1

    out = multi_head_attention(x, wq, wk, wv, wp, bp)
    out = jax.block_until_ready(out)

    ref = _reference(x, wq, wk, wv, wp, bp)
    assert out.shape == (B, T, d_model)
    # bf16 matmul operands + approx reciprocal -> compare at bf16-level tolerance
    assert jnp.allclose(out, ref, atol=5e-2, rtol=5e-2), "mismatch vs reference"

    print("KERNEL_OK")
</pallas_src>

<mosaic_0001>
module attributes {stable_mosaic.version = 11 : i64} {
  func.func @_qkv_proj_kernel(%arg0: i32, %arg1: i32, %arg2: memref<1x8x32xbf16, #tpu.memory_space<vmem>>, %arg3: memref<32x96xbf16, #tpu.memory_space<vmem>>, %arg4: memref<1x4x8x8xbf16, #tpu.memory_space<vmem>>, %arg5: memref<1x4x8x8xbf16, #tpu.memory_space<vmem>>, %arg6: memref<1x4x8x8xbf16, #tpu.memory_space<vmem>>) attributes {dimension_semantics = [#tpu.dimension_semantics<parallel>, #tpu.dimension_semantics<parallel>], iteration_bounds = array<i64: 2, 1>, scalar_prefetch = 0 : i64, scratch_operands = 0 : i64, tpu.core_type = #tpu.core_type<tc>, window_params = [{transform_indices = @transform_0, window_bounds = array<i64: 1, 8, 32>}, {pipeline_mode = #tpu.pipeline_mode<synchronous>, transform_indices = @transform_1, window_bounds = array<i64: 32, 96>}, {transform_indices = @transform_2, window_bounds = array<i64: 1, 4, 8, 8>}, {transform_indices = @transform_3, window_bounds = array<i64: 1, 4, 8, 8>}, {transform_indices = @transform_4, window_bounds = array<i64: 1, 4, 8, 8>}]} {
    %c0 = arith.constant 0 : index
    %c0_0 = arith.constant 0 : index
    %c0_1 = arith.constant 0 : index
    %0 = vector.load %arg2[%c0, %c0_0, %c0_1] : memref<1x8x32xbf16, #tpu.memory_space<vmem>>, vector<1x8x32xbf16>
    %1 = vector.shape_cast %0 : vector<1x8x32xbf16> to vector<8x32xbf16>
    %c0_2 = arith.constant 0 : index
    %c0_3 = arith.constant 0 : index
    %2 = vector.load %arg3[%c0_2, %c0_3] : memref<32x96xbf16, #tpu.memory_space<vmem>>, vector<32x96xbf16>
    %cst = arith.constant dense<0.000000e+00> : vector<8x96xf32>
    %3 = tpu.matmul %1, %2, %cst {dimension_numbers = #tpu.dot_dimension_numbers<[1], [0], [0], [1], [0, 0, 1, 1], [], []>} : vector<8x32xbf16>, vector<32x96xbf16>, vector<8x96xf32> -> vector<8x96xf32>
    %4 = arith.truncf %3 : vector<8x96xf32> to vector<8x96xbf16>
    %5 = vector.extract_strided_slice %4 {offsets = [0, 0], sizes = [8, 8], strides = [1, 1]} : vector<8x96xbf16> to vector<8x8xbf16>
    %c0_4 = arith.constant 0 : index
    %c0_5 = arith.constant 0 : index
    %c0_6 = arith.constant 0 : index
    %c0_7 = arith.constant 0 : index
    %6 = vector.load %arg4[%c0_4, %c0_5, %c0_6, %c0_7] : memref<1x4x8x8xbf16, #tpu.memory_space<vmem>>, vector<1x1x8x8xbf16>
    %7 = vector.shape_cast %6 : vector<1x1x8x8xbf16> to vector<8x8xbf16>
    %8 = vector.shape_cast %5 : vector<8x8xbf16> to vector<1x1x8x8xbf16>
    tpu.vector_store %arg4[%c0_4, %c0_5, %c0_6, %c0_7], %8 {strides = array<i32>} : memref<1x4x8x8xbf16, #tpu.memory_space<vmem>>, vector<1x1x8x8xbf16>,
    %9 = vector.extract_strided_slice %4 {offsets = [0, 32], sizes = [8, 8], strides = [1, 1]} : vector<8x96xbf16> to vector<8x8xbf16>
    %c0_8 = arith.constant 0 : index
    %c0_9 = arith.constant 0 : index
    %c0_10 = arith.constant 0 : index
    %c0_11 = arith.constant 0 : index
    %10 = vector.load %arg5[%c0_8, %c0_9, %c0_10, %c0_11] : memref<1x4x8x8xbf16, #tpu.memory_space<vmem>>, vector<1x1x8x8xbf16>
    %11 = vector.shape_cast %10 : vector<1x1x8x8xbf16> to vector<8x8xbf16>
    %12 = vector.shape_cast %9 : vector<8x8xbf16> to vector<1x1x8x8xbf16>
    tpu.vector_store %arg5[%c0_8, %c0_9, %c0_10, %c0_11], %12 {strides = array<i32>} : memref<1x4x8x8xbf16, #tpu.memory_space<vmem>>, vector<1x1x8x8xbf16>,
    %13 = vector.extract_strided_slice %4 {offsets = [0, 64], sizes = [8, 8], strides = [1, 1]} : vector<8x96xbf16> to vector<8x8xbf16>
    %c0_12 = arith.constant 0 : index
    %c0_13 = arith.constant 0 : index
    %c0_14 = arith.constant 0 : index
    %c0_15 = arith.constant 0 : index
    %14 = vector.load %arg6[%c0_12, %c0_13, %c0_14, %c0_15] : memref<1x4x8x8xbf16, #tpu.memory_space<vmem>>, vector<1x1x8x8xbf16>
    %15 = vector.shape_cast %14 : vector<1x1x8x8xbf16> to vector<8x8xbf16>
    %16 = vector.shape_cast %13 : vector<8x8xbf16> to vector<1x1x8x8xbf16>
    tpu.vector_store %arg6[%c0_12, %c0_13, %c0_14, %c0_15], %16 {strides = array<i32>} : memref<1x4x8x8xbf16, #tpu.memory_space<vmem>>, vector<1x1x8x8xbf16>,
    %17 = vector.extract_strided_slice %4 {offsets = [0, 8], sizes = [8, 8], strides = [1, 1]} : vector<8x96xbf16> to vector<8x8xbf16>
    %c0_16 = arith.constant 0 : index
    %c1 = arith.constant 1 : index
    %c0_17 = arith.constant 0 : index
    %c0_18 = arith.constant 0 : index
    %18 = vector.load %arg4[%c0_16, %c1, %c0_17, %c0_18] : memref<1x4x8x8xbf16, #tpu.memory_space<vmem>>, vector<1x1x8x8xbf16>
    %19 = vector.shape_cast %18 : vector<1x1x8x8xbf16> to vector<8x8xbf16>
    %20 = vector.shape_cast %17 : vector<8x8xbf16> to vector<1x1x8x8xbf16>
    tpu.vector_store %arg4[%c0_16, %c1, %c0_17, %c0_18], %20 {strides = array<i32>} : memref<1x4x8x8xbf16, #tpu.memory_space<vmem>>, vector<1x1x8x8xbf16>,
    %21 = vector.extract_strided_slice %4 {offsets = [0, 40], sizes = [8, 8], strides = [1, 1]} : vector<8x96xbf16> to vector<8x8xbf16>
    %c0_19 = arith.constant 0 : index
    %c1_20 = arith.constant 1 : index
    %c0_21 = arith.constant 0 : index
    %c0_22 = arith.constant 0 : index
    %22 = vector.load %arg5[%c0_19, %c1_20, %c0_21, %c0_22] : memref<1x4x8x8xbf16, #tpu.memory_space<vmem>>, vector<1x1x8x8xbf16>
    %23 = vector.shape_cast %22 : vector<1x1x8x8xbf16> to vector<8x8xbf16>
    %24 = vector.shape_cast %21 : vector<8x8xbf16> to vector<1x1x8x8xbf16>
    tpu.vector_store %arg5[%c0_19, %c1_20, %c0_21, %c0_22], %24 {strides = array<i32>} : memref<1x4x8x8xbf16, #tpu.memory_space<vmem>>, vector<1x1x8x8xbf16>,
    %25 = vector.extract_strided_slice %4 {offsets = [0, 72], sizes = [8, 8], strides = [1, 1]} : vector<8x96xbf16> to vector<8x8xbf16>
    %c0_23 = arith.constant 0 : index
    %c1_24 = arith.constant 1 : index
    %c0_25 = arith.constant 0 : index
    %c0_26 = arith.constant 0 : index
    %26 = vector.load %arg6[%c0_23, %c1_24, %c0_25, %c0_26] : memref<1x4x8x8xbf16, #tpu.memory_space<vmem>>, vector<1x1x8x8xbf16>
    %27 = vector.shape_cast %26 : vector<1x1x8x8xbf16> to vector<8x8xbf16>
    %28 = vector.shape_cast %25 : vector<8x8xbf16> to vector<1x1x8x8xbf16>
    tpu.vector_store %arg6[%c0_23, %c1_24, %c0_25, %c0_26], %28 {strides = array<i32>} : memref<1x4x8x8xbf16, #tpu.memory_space<vmem>>, vector<1x1x8x8xbf16>,
    %29 = vector.extract_strided_slice %4 {offsets = [0, 16], sizes = [8, 8], strides = [1, 1]} : vector<8x96xbf16> to vector<8x8xbf16>
    %c0_27 = arith.constant 0 : index
    %c2 = arith.constant 2 : index
    %c0_28 = arith.constant 0 : index
    %c0_29 = arith.constant 0 : index
    %30 = vector.load %arg4[%c0_27, %c2, %c0_28, %c0_29] : memref<1x4x8x8xbf16, #tpu.memory_space<vmem>>, vector<1x1x8x8xbf16>
    %31 = vector.shape_cast %30 : vector<1x1x8x8xbf16> to vector<8x8xbf16>
    %32 = vector.shape_cast %29 : vector<8x8xbf16> to vector<1x1x8x8xbf16>
    tpu.vector_store %arg4[%c0_27, %c2, %c0_28, %c0_29], %32 {strides = array<i32>} : memref<1x4x8x8xbf16, #tpu.memory_space<vmem>>, vector<1x1x8x8xbf16>,
    %33 = vector.extract_strided_slice %4 {offsets = [0, 48], sizes = [8, 8], strides = [1, 1]} : vector<8x96xbf16> to vector<8x8xbf16>
    %c0_30 = arith.constant 0 : index
    %c2_31 = arith.constant 2 : index
    %c0_32 = arith.constant 0 : index
    %c0_33 = arith.constant 0 : index
    %34 = vector.load %arg5[%c0_30, %c2_31, %c0_32, %c0_33] : memref<1x4x8x8xbf16, #tpu.memory_space<vmem>>, vector<1x1x8x8xbf16>
    %35 = vector.shape_cast %34 : vector<1x1x8x8xbf16> to vector<8x8xbf16>
    %36 = vector.shape_cast %33 : vector<8x8xbf16> to vector<1x1x8x8xbf16>
    tpu.vector_store %arg5[%c0_30, %c2_31, %c0_32, %c0_33], %36 {strides = array<i32>} : memref<1x4x8x8xbf16, #tpu.memory_space<vmem>>, vector<1x1x8x8xbf16>,
    %37 = vector.extract_strided_slice %4 {offsets = [0, 80], sizes = [8, 8], strides = [1, 1]} : vector<8x96xbf16> to vector<8x8xbf16>
    %c0_34 = arith.constant 0 : index
    %c2_35 = arith.constant 2 : index
    %c0_36 = arith.constant 0 : index
    %c0_37 = arith.constant 0 : index
    %38 = vector.load %arg6[%c0_34, %c2_35, %c0_36, %c0_37] : memref<1x4x8x8xbf16, #tpu.memory_space<vmem>>, vector<1x1x8x8xbf16>
    %39 = vector.shape_cast %38 : vector<1x1x8x8xbf16> to vector<8x8xbf16>
    %40 = vector.shape_cast %37 : vector<8x8xbf16> to vector<1x1x8x8xbf16>
    tpu.vector_store %arg6[%c0_34, %c2_35, %c0_36, %c0_37], %40 {strides = array<i32>} : memref<1x4x8x8xbf16, #tpu.memory_space<vmem>>, vector<1x1x8x8xbf16>,
    %41 = vector.extract_strided_slice %4 {offsets = [0, 24], sizes = [8, 8], strides = [1, 1]} : vector<8x96xbf16> to vector<8x8xbf16>
    %c0_38 = arith.constant 0 : index
    %c3 = arith.constant 3 : index
    %c0_39 = arith.constant 0 : index
    %c0_40 = arith.constant 0 : index
    %42 = vector.load %arg4[%c0_38, %c3, %c0_39, %c0_40] : memref<1x4x8x8xbf16, #tpu.memory_space<vmem>>, vector<1x1x8x8xbf16>
    %43 = vector.shape_cast %42 : vector<1x1x8x8xbf16> to vector<8x8xbf16>
    %44 = vector.shape_cast %41 : vector<8x8xbf16> to vector<1x1x8x8xbf16>
    tpu.vector_store %arg4[%c0_38, %c3, %c0_39, %c0_40], %44 {strides = array<i32>} : memref<1x4x8x8xbf16, #tpu.memory_space<vmem>>, vector<1x1x8x8xbf16>,
    %45 = vector.extract_strided_slice %4 {offsets = [0, 56], sizes = [8, 8], strides = [1, 1]} : vector<8x96xbf16> to vector<8x8xbf16>
    %c0_41 = arith.constant 0 : index
    %c3_42 = arith.constant 3 : index
    %c0_43 = arith.constant 0 : index
    %c0_44 = arith.constant 0 : index
    %46 = vector.load %arg5[%c0_41, %c3_42, %c0_43, %c0_44] : memref<1x4x8x8xbf16, #tpu.memory_space<vmem>>, vector<1x1x8x8xbf16>
    %47 = vector.shape_cast %46 : vector<1x1x8x8xbf16> to vector<8x8xbf16>
    %48 = vector.shape_cast %45 : vector<8x8xbf16> to vector<1x1x8x8xbf16>
    tpu.vector_store %arg5[%c0_41, %c3_42, %c0_43, %c0_44], %48 {strides = array<i32>} : memref<1x4x8x8xbf16, #tpu.memory_space<vmem>>, vector<1x1x8x8xbf16>,
    %49 = vector.extract_strided_slice %4 {offsets = [0, 88], sizes = [8, 8], strides = [1, 1]} : vector<8x96xbf16> to vector<8x8xbf16>
    %c0_45 = arith.constant 0 : index
    %c3_46 = arith.constant 3 : index
    %c0_47 = arith.constant 0 : index
    %c0_48 = arith.constant 0 : index
    %50 = vector.load %arg6[%c0_45, %c3_46, %c0_47, %c0_48] : memref<1x4x8x8xbf16, #tpu.memory_space<vmem>>, vector<1x1x8x8xbf16>
    %51 = vector.shape_cast %50 : vector<1x1x8x8xbf16> to vector<8x8xbf16>
    %52 = vector.shape_cast %49 : vector<8x8xbf16> to vector<1x1x8x8xbf16>
    tpu.vector_store %arg6[%c0_45, %c3_46, %c0_47, %c0_48], %52 {strides = array<i32>} : memref<1x4x8x8xbf16, #tpu.memory_space<vmem>>, vector<1x1x8x8xbf16>,
    return
  }
  func.func @transform_0(%arg0: i32, %arg1: i32) -> (i32, i32, i32) {
    %c0_i32 = arith.constant 0 : i32
    %c0_i32_0 = arith.constant 0 : i32
    return %arg0, %arg1, %c0_i32 : i32, i32, i32
  }
  func.func @transform_1(%arg0: i32, %arg1: i32) -> (i32, i32) {
    %c0_i32 = arith.constant 0 : i32
    %c0_i32_0 = arith.constant 0 : i32
    %c0_i32_1 = arith.constant 0 : i32
    return %c0_i32, %c0_i32_0 : i32, i32
  }
  func.func @transform_2(%arg0: i32, %arg1: i32) -> (i32, i32, i32, i32) {
    %c0_i32 = arith.constant 0 : i32
    %c0_i32_0 = arith.constant 0 : i32
    %c0_i32_1 = arith.constant 0 : i32
    return %arg0, %c0_i32, %arg1, %c0_i32_0 : i32, i32, i32, i32
  }
  func.func @transform_3(%arg0: i32, %arg1: i32) -> (i32, i32, i32, i32) {
    %c0_i32 = arith.constant 0 : i32
    %c0_i32_0 = arith.constant 0 : i32
    %c0_i32_1 = arith.constant 0 : i32
    return %arg0, %c0_i32, %arg1, %c0_i32_0 : i32, i32, i32, i32
  }
  func.func @transform_4(%arg0: i32, %arg1: i32) -> (i32, i32, i32, i32) {
    %c0_i32 = arith.constant 0 : i32
    %c0_i32_0 = arith.constant 0 : i32
    %c0_i32_1 = arith.constant 0 : i32
    return %arg0, %c0_i32, %arg1, %c0_i32_0 : i32, i32, i32, i32
  }
}

</mosaic_0001>

<llo_original>
// kernel: tpu_custom_call.1
$region0: #{tpu_custom_call.1}
  #allocation0 [shape = 'u32[]', space=smem, size = 0x4, offset = 0x4, fixed_abs, tag = 'smem constant byte address 0x4 - core index']
  #allocation1 [shape = 'u32[72,128]{1,0:T(1,128)}', space=vmem, size = 0x9000, scoped, tag = 'internal scratch']
  %s0 = inlined_call_operand.hbm [shape: bf16[2,8,32], index: 0, kind: input, shape index: {}]
  %s1 = inlined_call_operand.hbm [shape: bf16[32,96], index: 1, kind: input, shape index: {}]
  %s2 = inlined_call_operand.hbm [shape: bf16[2,4,8,8], index: 2, kind: output, shape index: {0}]
  %s3 = inlined_call_operand.hbm [shape: bf16[2,4,8,8], index: 3, kind: output, shape index: {1}]
  %s4 = inlined_call_operand.hbm [shape: bf16[2,4,8,8], index: 4, kind: output, shape index: {2}]
  %5 = xla_tuple %s2, %s3, %s4
  %s6 = sld [smem:[#allocation0]]
  $region65: #{tpu_custom_call.1} parent=0
    _
  %s8 = ssub.s32 1, %s6
  %s9 = scalar_select 0, %s8, %s6
  $region1: #{tpu_custom_call.1} parent=0
    #allocation2 [shape = 'u8[4096]{0}', space=vmem, size = 0x1000, scoped, tag = 'input window, operand 0']
    #allocation3 [shape = 's32[2]{0}', space=sflag, size = 0x8, scoped, tag = 'scoped memory for tpu_custom_call.1']
    #allocation4 [shape = 's32[2]{0}', space=sflag, size = 0x8, scoped, tag = 'scoped memory for tpu_custom_call.1']
    #allocation5 [shape = 'u8[8192]{0}', space=vmem, size = 0x2000, scoped, tag = 'input window, operand 1, single buffered']
    #allocation6 [shape = 's32[1]{0}', space=sflag, size = 0x4, scoped, tag = 'scoped memory for tpu_custom_call.1']
    #allocation7 [shape = 'u8[16384]{0}', space=vmem, size = 0x4000, scoped, tag = 'output window, operand 0']
    #allocation8 [shape = 'u8[16384]{0}', space=vmem, size = 0x4000, scoped, tag = 'output window, operand 1']
    #allocation9 [shape = 's32[2]{0}', space=sflag, size = 0x8, scoped, tag = 'scoped memory for tpu_custom_call.1']
    #allocation10 [shape = 'u8[16384]{0}', space=vmem, size = 0x4000, scoped, tag = 'output window, operand 2']
    %10 = vsyncpa [#allocation3], 0
    %s11 = scalar_lea.sflag [#allocation3], 1
    %12 = vsyncpa %s11, 0
    %13 = vsyncpa [#allocation6], 0
    %14 = vsyncpa [#allocation4], 0
    %s15 = scalar_lea.sflag [#allocation4], 1
    %16 = vsyncpa %s15, 0
    %17 = vsyncpa [#allocation9], 0
    %s18 = scalar_lea.sflag [#allocation9], 1
    %19 = vsyncpa %s18, 0
    loop: start=0, step=1, limit=4
    $region2: #{tpu_custom_call.1} parent=1 // loop_pre_header
      _
    $region3: #{tpu_custom_call.1} parent=1 // loop_header
      %s21 = sphi 0, %s25
      %p22 = scmp.ge.s32.totalorder %s21, 4
      %s28 = sphi 0, %s40
      %s29 = sphi 0, %s36
      %s30 = sphi 0, %s28
      %s31 = sphi 0, %s29
      %s32 = sphi 0, %s30
      %s33 = sphi 0, %s31
      %s45 = sphi 0, %s47
      %s48 = sphi 0, %s45
      %s49 = sphi 0, %s48
      %s65 = sphi 0, %s49
      %s69 = sphi 0, %s69
      %s71 = sphi 0, %s69
      %s72 = sphi 0, %s71
      %s86 = sphi 0, %s72
      %s94 = sphi 0, %s96
      %s97 = sphi 0, %s94
      %s98 = sphi 0, %s97
      %s114 = sphi 0, %s98
      %s122 = sphi 0, %s124
      %s125 = sphi 0, %s122
      %s126 = sphi 0, %s125
      %s142 = sphi 0, %s126
      %s150 = sphi 0, %s152
      %s153 = sphi 0, %s150
      %s154 = sphi 0, %s153
      %s170 = sphi 0, %s154
    $region4: #{tpu_custom_call.1} parent=1 // loop_header_branch
      %24 = sbr.rel (%p22) target = $region8
    $region5: #{tpu_custom_call.1} parent=1 // loop_body
      %s26 = ssub.s32 %s21, 1
      %s27 = ssub.s32 %s21, 2
      %s34 = sadd.s32 1, %s29
      %p35 = scmp.ge.s32.totalorder %s34, 1
      %s36 = scalar_select %p35, 0, %s34
      %s37 = sadd.s32 1, %s28
      %s38 = scalar_select %p35, %s37, %s28
      %p39 = scmp.ge.s32.totalorder %s38, 2
      %s40 = scalar_select %p39, 0, %s38
      %s41 = ssub.s32 %s28, %s40
      %s42 = ssub.s32 %s29, %s36
      %s43 = sor.u32 %s41, %s42
      %p44 = scmp.eq.s32.totalorder %s43, 0
      %s46 = sadd.s32 %s45, 1
      %s47 = scalar_select %p44, %s45, %s46
      %p50 = pneg %p44
      %p51 = scmp.eq.s32.totalorder %s21, 1
      %p52 = por %p50, %p51
      %p53 = scmp.ne.s32.totalorder %s45, %s48
      %p54 = scmp.eq.s32.totalorder %s21, 0
      %p55 = por %p53, %p54
      %p56 = scmp.ne.s32.totalorder %s45, %s48
      %p57 = scmp.eq.s32.totalorder %s26, 1
      %p58 = por %p56, %p57
      %p59 = scmp.ne.s32.totalorder %s48, %s49
      %p60 = scmp.eq.s32.totalorder %s26, 0
      %p61 = por %p59, %p60
      %p62 = scmp.ne.s32.totalorder %s48, %s49
      %p63 = scmp.eq.s32.totalorder %s27, 1
      %p64 = por %p62, %p63
      %p66 = scmp.ne.s32.totalorder %s49, %s65
      %p67 = scmp.eq.s32.totalorder %s27, 0
      %p68 = por %p66, %p67
      %s70 = sadd.s32 %s69, 1
      %p73 = scmp.eq.s32.totalorder %s21, 1
      %p74 = scmp.ne.s32.totalorder %s69, %s71
      %p75 = scmp.eq.s32.totalorder %s21, 0
      %p76 = por %p74, %p75
      %p77 = scmp.ne.s32.totalorder %s69, %s71
      %p78 = scmp.eq.s32.totalorder %s26, 1
      %p79 = por %p77, %p78
      %p80 = scmp.ne.s32.totalorder %s71, %s72
      %p81 = scmp.eq.s32.totalorder %s26, 0
      %p82 = por %p80, %p81
      %p83 = scmp.ne.s32.totalorder %s71, %s72
      %p84 = scmp.eq.s32.totalorder %s27, 1
      %p85 = por %p83, %p84
      %p87 = scmp.ne.s32.totalorder %s72, %s86
      %p88 = scmp.eq.s32.totalorder %s27, 0
      %p89 = por %p87, %p88
      %s90 = ssub.s32 %s28, %s40
      %s91 = ssub.s32 %s29, %s36
      %s92 = sor.u32 %s90, %s91
      %p93 = scmp.eq.s32.totalorder %s92, 0
      %s95 = sadd.s32 %s94, 1
      %s96 = scalar_select %p93, %s94, %s95
      %p99 = pneg %p93
      %p100 = scmp.eq.s32.totalorder %s21, 1
      %p101 = por %p99, %p100
      %p102 = scmp.ne.s32.totalorder %s94, %s97
      %p103 = scmp.eq.s32.totalorder %s21, 0
      %p104 = por %p102, %p103
      %p105 = scmp.ne.s32.totalorder %s94, %s97
      %p106 = scmp.eq.s32.totalorder %s26, 1
      %p107 = por %p105, %p106
      %p108 = scmp.ne.s32.totalorder %s97, %s98
      %p109 = scmp.eq.s32.totalorder %s26, 0
      %p110 = por %p108, %p109
      %p111 = scmp.ne.s32.totalorder %s97, %s98
      %p112 = scmp.eq.s32.totalorder %s27, 1
      %p113 = por %p111, %p112
      %p115 = scmp.ne.s32.totalorder %s98, %s114
      %p116 = scmp.eq.s32.totalorder %s27, 0
      %p117 = por %p115, %p116
      %s118 = ssub.s32 %s28, %s40
      %s119 = ssub.s32 %s29, %s36
      %s120 = sor.u32 %s118, %s119
      %p121 = scmp.eq.s32.totalorder %s120, 0
      %s123 = sadd.s32 %s122, 1
      %s124 = scalar_select %p121, %s122, %s123
      %p127 = pneg %p121
      %p128 = scmp.eq.s32.totalorder %s21, 1
      %p129 = por %p127, %p128
      %p130 = scmp.ne.s32.totalorder %s122, %s125
      %p131 = scmp.eq.s32.totalorder %s21, 0
      %p132 = por %p130, %p131
      %p133 = scmp.ne.s32.totalorder %s122, %s125
      %p134 = scmp.eq.s32.totalorder %s26, 1
      %p135 = por %p133, %p134
      %p136 = scmp.ne.s32.totalorder %s125, %s126
      %p137 = scmp.eq.s32.totalorder %s26, 0
      %p138 = por %p136, %p137
      %p139 = scmp.ne.s32.totalorder %s125, %s126
      %p140 = scmp.eq.s32.totalorder %s27, 1
      %p141 = por %p139, %p140
      %p143 = scmp.ne.s32.totalorder %s126, %s142
      %p144 = scmp.eq.s32.totalorder %s27, 0
      %p145 = por %p143, %p144
      %s146 = ssub.s32 %s28, %s40
      %s147 = ssub.s32 %s29, %s36
      %s148 = sor.u32 %s146, %s147
      %p149 = scmp.eq.s32.totalorder %s148, 0
      %s151 = sadd.s32 %s150, 1
      %s152 = scalar_select %p149, %s150, %s151
      %p155 = pneg %p149
      %p156 = scmp.eq.s32.totalorder %s21, 1
      %p157 = por %p155, %p156
      %p158 = scmp.ne.s32.totalorder %s150, %s153
      %p159 = scmp.eq.s32.totalorder %s21, 0
      %p160 = por %p158, %p159
      %p161 = scmp.ne.s32.totalorder %s150, %s153
      %p162 = scmp.eq.s32.totalorder %s26, 1
      %p163 = por %p161, %p162
      %p164 = scmp.ne.s32.totalorder %s153, %s154
      %p165 = scmp.eq.s32.totalorder %s26, 0
      %p166 = por %p164, %p165
      %p167 = scmp.ne.s32.totalorder %s153, %s154
      %p168 = scmp.eq.s32.totalorder %s27, 1
      %p169 = por %p167, %p168
      %p171 = scmp.ne.s32.totalorder %s154, %s170
      %p172 = scmp.eq.s32.totalorder %s27, 0
      %p173 = por %p171, %p172
      %p174 = scmp.le.s32.totalorder 1, %s21
      %p175 = scmp.lt.s32.totalorder %s21, 3
      %p176 = pnand %p174, %p175
      %p177 = pneg %p176
      // Predicated region
      $region9: #{tpu_custom_call.1} parent=5 // pred_check
        _
      $region10: #{tpu_custom_call.1} parent=5 // pred_check_branch
        %179 = sbr.rel (%p176) target = $region12
      $region11: #{tpu_custom_call.1} parent=5 // pred_region
        %s180 = ssub.s32 %s21, 1
        // Predicated region
        $region13: #{tpu_custom_call.1} parent=11 // pred_check
          %p181 = pneg %p82
        $region14: #{tpu_custom_call.1} parent=11 // pred_check_branch
          %183 = sbr.rel (%p181) target = $region16
        $region15: #{tpu_custom_call.1} parent=11 // pred_region
          %185 = vsyncadd [#allocation6], 0
          %s186 = sshll.u32 %s1, 4
          %s187 = int_to_ptr.hbm [resolvable:$true] %s186
          %s188 = sshll.u32 [#allocation5], 4
          %s189 = int_to_ptr.vmem [resolvable:$true] %s188
          %194 = dma.hbm_to_vmem [thread:$0]  %s187, 256, %s189, [#allocation6], 64, 64, 4
        $region16: #{tpu_custom_call.1} parent=11 // pred_fallthru
          _
      $region12: #{tpu_custom_call.1} parent=5 // pred_fallthru
        _
      %p195 = scmp.lt.s32.totalorder %s21, 2
      // Predicated region
      $region17: #{tpu_custom_call.1} parent=5 // pred_check
        %p196 = pneg %p195
      $region18: #{tpu_custom_call.1} parent=5 // pred_check_branch
        %198 = sbr.rel (%p196) target = $region20
      $region19: #{tpu_custom_call.1} parent=5 // pred_region
        // Predicated region
        $region21: #{tpu_custom_call.1} parent=19 // pred_check
          %p199 = pneg %p55
        $region22: #{tpu_custom_call.1} parent=19 // pred_check_branch
          %201 = sbr.rel (%p199) target = $region24
        $region23: #{tpu_custom_call.1} parent=19 // pred_region
          %s202 = sand.u32 %s45, 1
          %s203 = scalar_lea.sflag [#allocation3], %s202
          %s204 = sand.u32 %s45, 1
          %s205 = smul.addr %s204, 4
          %s206 = scalar_lea.vmem [#allocation2], %s205
          %208 = vsyncadd %s203, 0
          %s209 = sadd.s32 %s29, %s28
          %s210 = smul.addr %s209, 4
          %s211 = scalar_lea.hbm %s0, %s210
          %s213 = sshll.u32 %s211, 4
          %s214 = int_to_ptr.hbm [resolvable:$true] %s213
          %s215 = sshll.u32 %s206, 4
          %s216 = int_to_ptr.vmem [resolvable:$true] %s215
          %218 = dma.hbm_to_vmem [thread:$0]  %s214, 64, %s216, %s203
        $region24: #{tpu_custom_call.1} parent=19 // pred_fallthru
          _
      $region20: #{tpu_custom_call.1} parent=5 // pred_fallthru
        _
      %p219 = scmp.le.s32.totalorder 1, %s21
      %p220 = scmp.lt.s32.totalorder %s21, 3
      %p221 = pnand %p219, %p220
      %p222 = pneg %p221
      // Predicated region
      $region25: #{tpu_custom_call.1} parent=5 // pred_check
        _
      $region26: #{tpu_custom_call.1} parent=5 // pred_check_branch
        %224 = sbr.rel (%p221) target = $region28
      $region27: #{tpu_custom_call.1} parent=5 // pred_region
        %s225 = ssub.s32 %s21, 1
        %s226 = sand.u32 %s48, 1
        %s227 = scalar_lea.sflag [#allocation3], %s226
        %s228 = sand.u32 %s48, 1
        %s229 = smul.addr %s228, 4
        %s230 = scalar_lea.vmem [#allocation2], %s229
        // Predicated region
        $region29: #{tpu_custom_call.1} parent=27 // pred_check
          %p231 = pneg %p61
        $region30: #{tpu_custom_call.1} parent=27 // pred_check_branch
          %233 = sbr.rel (%p231) target = $region32
        $region31: #{tpu_custom_call.1} parent=27 // pred_region
          %235 = dma.done %s227, 64
        $region32: #{tpu_custom_call.1} parent=27 // pred_fallthru
          _
        // Predicated region
        $region33: #{tpu_custom_call.1} parent=27 // pred_check
          %p236 = pneg %p82
        $region34: #{tpu_custom_call.1} parent=27 // pred_check_branch
          %238 = sbr.rel (%p236) target = $region36
        $region35: #{tpu_custom_call.1} parent=27 // pred_region
          %240 = dma.done [#allocation6], 256
        $region36: #{tpu_custom_call.1} parent=27 // pred_fallthru
          _
        %s241 = sand.u32 %s48, 1
        %s242 = scalar_lea.sflag [#allocation3], %s241
        %s243 = sand.u32 %s48, 1
        %s244 = smul.addr %s243, 4
        %s245 = scalar_lea.vmem [#allocation2], %s244
        %p246 = pneg %p61
        %p247 = pneg %p58
        %p248 = pneg %p82
        %p249 = pneg %p79
        %p250 = pneg %p110
        %p251 = pneg %p107
        %s252 = sand.u32 %s97, 1
        %s253 = scalar_lea.sflag [#allocation4], %s252
        %s254 = sand.u32 %s97, 1
        %s255 = smul.addr %s254, 16
        %s256 = scalar_lea.vmem [#allocation7], %s255
        %p257 = pneg %p138
        %p258 = pneg %p135
        %s259 = sand.u32 %s26, 1
        %s260 = scalar_lea.sflag [#allocation9], %s259
        %s261 = sand.u32 %s125, 1
        %s262 = smul.addr %s261, 16
        %s263 = scalar_lea.vmem [#allocation8], %s262
        %p264 = pneg %p166
        %p265 = pneg %p163
        %s266 = sand.u32 %s26, 1
        %s267 = scalar_lea.sflag [#allocation9], %s266
        %s268 = sand.u32 %s153, 1
        %s269 = smul.addr %s268, 16
        %s270 = scalar_lea.vmem [#allocation10], %s269
        %v272 = vld [vmem:[%s230] sm:$0xf]
        %v273 = vld [vmem:[#allocation5] sm:$0xf]
        %v274 = vld [vmem:[#allocation5 + $0x4] sm:$0xf]
        %v275 = vld [vmem:[#allocation5 + $0x8] sm:$0xf]
        %v276 = vld [vmem:[#allocation5 + $0xc] sm:$0xf]
        %v281 = vunpack.c.l.b16 %v273
        %v282 = vunpack.c.l.b16 %v274
        %v283 = vunpack.c.l.b16 %v275
        %v284 = vunpack.c.l.b16 %v276
        %v285 = vpack.c.b16 %v282, %v281
        %v286 = vpack.c.b16 %v284, %v283
        %vm289 = vcmask 261120
        %v291 = vsel %vm289, %v272, 0
        %293 = vmatpush.bf16.msra.mxu0 0
        %294 = vmatpush.bf16.msra.mxu0 0
        %295 = vmatpush.bf16.msra.mxu0 0
        %296 = vmatpush.bf16.msra.mxu0 0
        %297 = vmatpush.bf16.msra.mxu0 0
        %298 = vmatpush.bf16.msra.mxu0 0
        %299 = vmatpush.bf16.msra.mxu0 %v286
        %300 = vmatpush.bf16.msra.mxu0 %v285
        %301 = vmatmul.bf16.gmra.mxu0 %v291
        %v302 = vpop.f32.mrf.mxu0
        %v303 = vadd.f32 0.0, %v302
        %v304 = vpop.f32.mrf.mxu0
        %305 = vdwg.mxu0
        %v306 = vpack.c.bf16 %v303, %v303
        %vm307 = vcmask 60416
        %308 = vst.msk [vmem:[%s256] sm:$0xf] %vm307, %v306
        %310 = vrot.lane.b32.xlu0 %v306, 96
        %v311 = vpop.permute.xlu0 %310
        %313 = vst.msk [vmem:[%s263] sm:$0xf] %vm307, %v311
        %314 = vrot.lane.b32.xlu0 %v306, 64
        %v315 = vpop.permute.xlu0 %314
        %317 = vst.msk [vmem:[%s270] sm:$0xf] %vm307, %v315
        %318 = vrot.lane.b32.xlu0 %v306, 120
        %v319 = vpop.permute.xlu0 %318
        %s321 = scalar_lea.vmem %s256, 4 [#allocation7]
        %322 = vst.msk [vmem:[%s321] sm:$0xf] %vm307, %v319
        %323 = vrot.lane.b32.xlu0 %v306, 88
        %v324 = vpop.permute.xlu0 %323
        %s326 = scalar_lea.vmem %s263, 4 [#allocation8]
        %327 = vst.msk [vmem:[%s326] sm:$0xf] %vm307, %v324
        %328 = vrot.lane.b32.xlu0 %v306, 56
        %v329 = vpop.permute.xlu0 %328
        %s331 = scalar_lea.vmem %s270, 4 [#allocation10]
        %332 = vst.msk [vmem:[%s331] sm:$0xf] %vm307, %v329
        %333 = vrot.lane.b32.xlu0 %v306, 112
        %v334 = vpop.permute.xlu0 %333
        %s336 = scalar_lea.vmem %s256, 8 [#allocation7]
        %337 = vst.msk [vmem:[%s336] sm:$0xf] %vm307, %v334
        %338 = vrot.lane.b32.xlu0 %v306, 80
        %v339 = vpop.permute.xlu0 %338
        %s341 = scalar_lea.vmem %s263, 8 [#allocation8]
        %342 = vst.msk [vmem:[%s341] sm:$0xf] %vm307, %v339
        %343 = vrot.lane.b32.xlu0 %v306, 48
        %v344 = vpop.permute.xlu0 %343
        %s346 = scalar_lea.vmem %s270, 8 [#allocation10]
        %347 = vst.msk [vmem:[%s346] sm:$0xf] %vm307, %v344
        %348 = vrot.lane.b32.xlu0 %v306, 104
        %v349 = vpop.permute.xlu0 %348
        %s351 = scalar_lea.vmem %s256, 12 [#allocation7]
        %352 = vst.msk [vmem:[%s351] sm:$0xf] %vm307, %v349
        %353 = vrot.lane.b32.xlu0 %v306, 72
        %v354 = vpop.permute.xlu0 %353
        %s356 = scalar_lea.vmem %s263, 12 [#allocation8]
        %357 = vst.msk [vmem:[%s356] sm:$0xf] %vm307, %v354
        %358 = vrot.lane.b32.xlu0 %v306, 40
        %v359 = vpop.permute.xlu0 %358
        %s361 = scalar_lea.vmem %s270, 12 [#allocation10]
        %362 = vst.msk [vmem:[%s361] sm:$0xf] %vm307, %v359
        %s363 = sand.u32 %s97, 1
        %s364 = scalar_lea.sflag [#allocation4], %s363
        %s365 = sand.u32 %s97, 1
        %s366 = smul.addr %s365, 16
        %s367 = scalar_lea.vmem [#allocation7], %s366
        %s368 = sand.u32 %s26, 1
        %s369 = scalar_lea.sflag [#allocation9], %s368
        %s370 = sand.u32 %s125, 1
        %s371 = smul.addr %s370, 16
        %s372 = scalar_lea.vmem [#allocation8], %s371
        %s373 = sand.u32 %s26, 1
        %s374 = scalar_lea.sflag [#allocation9], %s373
        %s375 = sand.u32 %s153, 1
        %s376 = smul.addr %s375, 16
        %s377 = scalar_lea.vmem [#allocation10], %s376
        // Predicated region
        $region37: #{tpu_custom_call.1} parent=27 // pred_check
          %p378 = pneg %p107
        $region38: #{tpu_custom_call.1} parent=27 // pred_check_branch
          %380 = sbr.rel (%p378) target = $region40
        $region39: #{tpu_custom_call.1} parent=27 // pred_region
          %382 = vsyncadd %s364, 0
          %s383 = smul.addr %s30, 4
          %s384 = sadd.s32 %s31, %s383
          %s385 = smul.addr %s384, 4
          %s386 = scalar_lea.hbm %s2, %s385
          %s387 = sshll.u32 %s367, 4
          %s388 = int_to_ptr.vmem [resolvable:$true] %s387
          %s389 = sshll.u32 %s386, 4
          %s390 = int_to_ptr.hbm [resolvable:$true] %s389
          %395 = dma.vmem_to_hbm [thread:$0]  %s388, 256, %s390, %s364, 64, 64, 4
        $region40: #{tpu_custom_call.1} parent=27 // pred_fallthru
          _
        // Predicated region
        $region41: #{tpu_custom_call.1} parent=27 // pred_check
          %p396 = pneg %p135
        $region42: #{tpu_custom_call.1} parent=27 // pred_check_branch
          %398 = sbr.rel (%p396) target = $region44
        $region43: #{tpu_custom_call.1} parent=27 // pred_region
          %400 = vsyncadd %s369, 0
          %s401 = smul.addr %s30, 4
          %s402 = sadd.s32 %s31, %s401
          %s403 = smul.addr %s402, 4
          %s404 = scalar_lea.hbm %s3, %s403
          %s405 = sshll.u32 %s372, 4
          %s406 = int_to_ptr.vmem [resolvable:$true] %s405
          %s407 = sshll.u32 %s404, 4
          %s408 = int_to_ptr.hbm [resolvable:$true] %s407
          %413 = dma.vmem_to_hbm [thread:$0]  %s406, 256, %s408, %s369, 64, 64, 4
        $region44: #{tpu_custom_call.1} parent=27 // pred_fallthru
          _
        // Predicated region
        $region45: #{tpu_custom_call.1} parent=27 // pred_check
          %p414 = pneg %p163
        $region46: #{tpu_custom_call.1} parent=27 // pred_check_branch
          %416 = sbr.rel (%p414) target = $region48
        $region47: #{tpu_custom_call.1} parent=27 // pred_region
          %418 = vsyncadd %s374, 0
          %s419 = smul.addr %s30, 4
          %s420 = sadd.s32 %s31, %s419
          %s421 = smul.addr %s420, 4
          %s422 = scalar_lea.hbm %s4, %s421
          %s423 = sshll.u32 %s377, 4
          %s424 = int_to_ptr.vmem [resolvable:$true] %s423
          %s425 = sshll.u32 %s422, 4
          %s426 = int_to_ptr.hbm [resolvable:$true] %s425
          %431 = dma.vmem_to_hbm [thread:$0]  %s424, 256, %s426, %s374, 64, 64, 4
        $region48: #{tpu_custom_call.1} parent=27 // pred_fallthru
          _
      $region28: #{tpu_custom_call.1} parent=5 // pred_fallthru
        _
      %p432 = scmp.le.s32.totalorder 2, %s21
      // Predicated region
      $region49: #{tpu_custom_call.1} parent=5 // pred_check
        %p433 = pneg %p432
      $region50: #{tpu_custom_call.1} parent=5 // pred_check_branch
        %435 = sbr.rel (%p433) target = $region52
      $region51: #{tpu_custom_call.1} parent=5 // pred_region
        %s436 = ssub.s32 %s21, 2
        // Predicated region
        $region53: #{tpu_custom_call.1} parent=51 // pred_check
          %p437 = pneg %p113
        $region54: #{tpu_custom_call.1} parent=51 // pred_check_branch
          %439 = sbr.rel (%p437) target = $region56
        $region55: #{tpu_custom_call.1} parent=51 // pred_region
          %s440 = sand.u32 %s98, 1
          %s441 = scalar_lea.sflag [#allocation4], %s440
          %s442 = sand.u32 %s98, 1
          %s443 = smul.addr %s442, 16
          %s444 = scalar_lea.vmem [#allocation7], %s443
          %446 = dma.done %s441, 256
        $region56: #{tpu_custom_call.1} parent=51 // pred_fallthru
          _
        // Predicated region
        $region57: #{tpu_custom_call.1} parent=51 // pred_check
          %p447 = pneg %p141
        $region58: #{tpu_custom_call.1} parent=51 // pred_check_branch
          %449 = sbr.rel (%p447) target = $region60
        $region59: #{tpu_custom_call.1} parent=51 // pred_region
          %s450 = sand.u32 %s27, 1
          %s451 = scalar_lea.sflag [#allocation9], %s450
          %s452 = sand.u32 %s126, 1
          %s453 = smul.addr %s452, 16
          %s454 = scalar_lea.vmem [#allocation8], %s453
          %456 = dma.done %s451, 256
        $region60: #{tpu_custom_call.1} parent=51 // pred_fallthru
          _
        // Predicated region
        $region61: #{tpu_custom_call.1} parent=51 // pred_check
          %p457 = pneg %p169
        $region62: #{tpu_custom_call.1} parent=51 // pred_check_branch
          %459 = sbr.rel (%p457) target = $region64
        $region63: #{tpu_custom_call.1} parent=51 // pred_region
          %s460 = sand.u32 %s27, 1
          %s461 = scalar_lea.sflag [#allocation9], %s460
          %s462 = sand.u32 %s154, 1
          %s463 = smul.addr %s462, 16
          %s464 = scalar_lea.vmem [#allocation10], %s463
          %466 = dma.done %s461, 256
        $region64: #{tpu_custom_call.1} parent=51 // pred_fallthru
          _
      $region52: #{tpu_custom_call.1} parent=5 // pred_fallthru
        _
    $region6: #{tpu_custom_call.1} parent=1 // loop_footer
      %s25 = sadd.s32 1, %s21
    $region7: #{tpu_custom_call.1} parent=1 // loop_footer_branch
      %20 = sbr.rel target = $region3
    $region8: #{tpu_custom_call.1} parent=1 // loop_exit
      _
    %467 = vsyncpa [#allocation3], 1
    %s468 = scalar_lea.sflag [#allocation3], 1
    %469 = vsyncpa %s468, 1
    %470 = vsyncpa [#allocation6], 1
    %471 = vsyncpa [#allocation4], 1
    %s472 = scalar_lea.sflag [#allocation4], 1
    %473 = vsyncpa %s472, 1
    %474 = vsyncpa [#allocation9], 1
    %s475 = scalar_lea.sflag [#allocation9], 1
    %476 = vsyncpa %s475, 1

</llo_original>
